<compile_context>
chip_gen: v5e
topology: v5e:2x2
jax: 0.10.0
libtpu: 0.0.40
codegen_flags: <defaults>
</compile_context>

<pallas_src>
import jax
import jax.numpy as jnp
from jax.experimental import pallas as pl
from jax.experimental.pallas import tpu as pltpu


# ----------------------------------------------------------------------------
# Pallas kernel (one invocation, whole problem):
#   for each batch b (static unroll, B is tiny):
#     noisy = a_b * img_b + s_b * noise_b                      (C,  HW) f32
#     h     = relu(W1^T @ noisy_bf16 + (b1 + tw * tn_b))       (Hd, HW) f32 acc
#     pred  = W2^T @ h_bf16 + b2                               (C,  HW) f32 acc
#     acc  += sum_over_channels((pred - noise_b)^2)            (1,  HW)
#   loss_ref <- acc   (lane-dense partial; wrapper finishes lane sum / mean)
# ----------------------------------------------------------------------------
def ddpm_kernel(coef_ref, img_ref, noise_ref,
                w1t_ref, b1_ref, tw_ref, w2t_ref, b2_ref, loss_ref):
    B = img_ref.shape[0]

    acc = jnp.zeros(loss_ref.shape, jnp.float32)      # (1, HW)
    for b in range(B):                                 # static unroll, B is small
        # Per-batch scalars from SMEM (cheap scalar reads -> vreg splats).
        a = coef_ref[0, b]
        s = coef_ref[1, b]
        tn = coef_ref[2, b]

        img = img_ref[b]                               # (C, HW) f32
        nz = noise_ref[b]                              # (C, HW) f32

        # Noising in f32 on the VPU (keeps the MSE target exact in f32).
        noisy = a * img + s * nz                       # (C, HW) f32

        # First pointwise layer on the MXU: bf16 operands, f32 accumulation.
        h = jnp.dot(w1t_ref[...], noisy.astype(jnp.bfloat16),
                    preferred_element_type=jnp.float32)            # (Hd, HW)
        # Bias + time embedding: combine the two width-1 columns first, then
        # one lane-broadcast add.
        h = jnp.maximum(h + (b1_ref[...] + tw_ref[...] * tn), 0.0)

        # Second pointwise layer.
        pred = jnp.dot(w2t_ref[...], h.astype(jnp.bfloat16),
                       preferred_element_type=jnp.float32)         # (C, HW)
        pred = pred + b2_ref[...]

        diff = pred - nz                               # f32
        # Sublane (channel) reduction only; the 256-lane sum finishes outside.
        acc = acc + jnp.sum(diff * diff, axis=0, keepdims=True)

    loss_ref[...] = acc


def ddpm_forward(imgs_nchw, key, params, sched, T):
    """Returns the scalar MSE loss, matching DDPM.forward semantics."""
    B, C, H, W = imgs_nchw.shape
    HW = H * W
    Hd = params["w1"].shape[1]

    # Lane-dense last axis: H*W must be a multiple of 128.
    assert HW % 128 == 0, "H*W must be a multiple of 128 for lane-dense tiling"

    k_t, k_n = jax.random.split(key)
    # t ~ Uniform{1, ..., T}  (torch.randint(low=1, high=T+1)); the schedule
    # tables have length T+1 and are indexed at t, exactly as in the spec.
    t = jax.random.randint(k_t, (B,), 1, T + 1)
    noise_nchw = jax.random.normal(k_n, imgs_nchw.shape, jnp.float32)

    a = sched["sqrt_bar_alpha"][t].astype(jnp.float32)          # (B,)
    s = sched["sqrt_minus_bar_alpha"][t].astype(jnp.float32)    # (B,)
    tn = t.astype(jnp.float32) / float(T)                       # (B,)
    coefs = jnp.stack([a, s, tn], axis=0)                       # (3, B) f32 -> SMEM

    # Free metadata reshapes: keep the natural (B, C, H*W) layout, f32.
    img3 = imgs_nchw.reshape(B, C, HW)
    noise3 = noise_nchw.reshape(B, C, HW)

    # Transposed weights (bf16 for the MXU) and f32 bias / time-embedding columns.
    w1t = params["w1"].T.astype(jnp.bfloat16)                   # (Hd, C)
    w2t = params["w2"].T.astype(jnp.bfloat16)                   # (C, Hd)
    b1c = params["b1"].reshape(Hd, 1).astype(jnp.float32)
    twc = params["tw"].reshape(Hd, 1).astype(jnp.float32)
    b2c = params["b2"].reshape(C, 1).astype(jnp.float32)

    partial = pl.pallas_call(
        ddpm_kernel,
        out_shape=jax.ShapeDtypeStruct((1, HW), jnp.float32),
        grid_spec=pltpu.PrefetchScalarGridSpec(
            num_scalar_prefetch=0,
            grid=(1,),
            in_specs=[
                pl.BlockSpec(memory_space=pltpu.MemorySpace.SMEM),  # (3, B) coefs
                pl.BlockSpec((B, C, HW), lambda i: (0, 0, 0)),      # img  (B,C,HW)
                pl.BlockSpec((B, C, HW), lambda i: (0, 0, 0)),      # noise(B,C,HW)
                pl.BlockSpec((Hd, C), lambda i: (0, 0)),            # w1^T
                pl.BlockSpec((Hd, 1), lambda i: (0, 0)),            # b1 column
                pl.BlockSpec((Hd, 1), lambda i: (0, 0)),            # tw column
                pl.BlockSpec((C, Hd), lambda i: (0, 0)),            # w2^T
                pl.BlockSpec((C, 1), lambda i: (0, 0)),             # b2 column
            ],
            out_specs=pl.BlockSpec((1, HW), lambda i: (0, 0)),
        ),
        compiler_params=pltpu.CompilerParams(
            dimension_semantics=("arbitrary",)),
    )(coefs, img3, noise3, w1t, b1c, twc, w2t, b2c)

    # nn.MSELoss(): mean over every element (finish the lane sum here).
    return jnp.sum(partial) / float(B * C * H * W)


def make_schedules(T):
    # Matches the reference module's buffer construction exactly:
    # beta has T+1 entries (index 0 included in the cumprod), indexed at t in [1, T].
    beta = jnp.linspace(0.0001, 0.02, T + 1)
    alpha = 1.0 - beta
    bar_alpha = jnp.cumprod(alpha)
    return {
        "beta": beta,
        "alpha": alpha,
        "bar_alpha": bar_alpha,
        "sqrt_bar_alpha": jnp.sqrt(bar_alpha),
        "sqrt_minus_bar_alpha": jnp.sqrt(1.0 - bar_alpha),
    }


def make_eps_model_params(key, C, Hd):
    k1, k2, k3 = jax.random.split(key, 3)
    return {
        "w1": (jax.random.normal(k1, (C, Hd), jnp.float32) * 0.1),
        "b1": jnp.zeros((1, Hd), jnp.float32),
        "tw": (jax.random.normal(k3, (1, Hd), jnp.float32) * 0.1),
        "w2": (jax.random.normal(k2, (Hd, C), jnp.float32) * 0.1),
        "b2": jnp.zeros((1, C), jnp.float32),
    }


if __name__ == "__main__":
    T = 1000
    B, C, H, W = 2, 4, 16, 16
    Hd = 32

    root = jax.random.PRNGKey(0)
    k_img, k_param, k_fwd = jax.random.split(root, 3)

    imgs = jax.random.normal(k_img, (B, C, H, W), jnp.float32)
    params = make_eps_model_params(k_param, C, Hd)
    sched = make_schedules(T)

    # TODO(synk): the reference module accepts an arbitrary eps_model; only the
    # synthetic pointwise-MLP epsilon-predictor defined above is fused here.
    loss = ddpm_forward(imgs, k_fwd, params, sched, T)
    loss = jax.block_until_ready(loss)
    assert loss.shape == () and jnp.isfinite(loss)
    print("KERNEL_OK")
</pallas_src>

<mosaic_0001>
module attributes {stable_mosaic.version = 11 : i64} {
  func.func @ddpm_kernel(%arg0: i32, %arg1: memref<3x2xf32, #tpu.memory_space<smem>>, %arg2: memref<2x4x256xf32, #tpu.memory_space<vmem>>, %arg3: memref<2x4x256xf32, #tpu.memory_space<vmem>>, %arg4: memref<32x4xbf16, #tpu.memory_space<vmem>>, %arg5: memref<32x1xf32, #tpu.memory_space<vmem>>, %arg6: memref<32x1xf32, #tpu.memory_space<vmem>>, %arg7: memref<4x32xbf16, #tpu.memory_space<vmem>>, %arg8: memref<4x1xf32, #tpu.memory_space<vmem>>, %arg9: memref<1x256xf32, #tpu.memory_space<vmem>>) attributes {dimension_semantics = [#tpu.dimension_semantics<arbitrary>], iteration_bounds = array<i64: 1>, scalar_prefetch = 0 : i64, scratch_operands = 0 : i64, tpu.core_type = #tpu.core_type<tc>, window_params = [{transform_indices = @transform_0, window_bounds = array<i64: 3, 2>}, {pipeline_mode = #tpu.pipeline_mode<synchronous>, transform_indices = @transform_1, window_bounds = array<i64: 2, 4, 256>}, {pipeline_mode = #tpu.pipeline_mode<synchronous>, transform_indices = @transform_2, window_bounds = array<i64: 2, 4, 256>}, {pipeline_mode = #tpu.pipeline_mode<synchronous>, transform_indices = @transform_3, window_bounds = array<i64: 32, 4>}, {pipeline_mode = #tpu.pipeline_mode<synchronous>, transform_indices = @transform_4, window_bounds = array<i64: 32, 1>}, {pipeline_mode = #tpu.pipeline_mode<synchronous>, transform_indices = @transform_5, window_bounds = array<i64: 32, 1>}, {pipeline_mode = #tpu.pipeline_mode<synchronous>, transform_indices = @transform_6, window_bounds = array<i64: 4, 32>}, {pipeline_mode = #tpu.pipeline_mode<synchronous>, transform_indices = @transform_7, window_bounds = array<i64: 4, 1>}, {pipeline_mode = #tpu.pipeline_mode<synchronous>, transform_indices = @transform_8, window_bounds = array<i64: 1, 256>}]} {
    %cst = arith.constant 0.000000e+00 : f32
    %0 = vector.broadcast %cst : f32 to vector<1x256xf32>
    %c0 = arith.constant 0 : index
    %c0_0 = arith.constant 0 : index
    %1 = memref.load %arg1[%c0, %c0_0] : memref<3x2xf32, #tpu.memory_space<smem>>
    %c1 = arith.constant 1 : index
    %c0_1 = arith.constant 0 : index
    %2 = memref.load %arg1[%c1, %c0_1] : memref<3x2xf32, #tpu.memory_space<smem>>
    %c2 = arith.constant 2 : index
    %c0_2 = arith.constant 0 : index
    %3 = memref.load %arg1[%c2, %c0_2] : memref<3x2xf32, #tpu.memory_space<smem>>
    %c0_3 = arith.constant 0 : index
    %c0_4 = arith.constant 0 : index
    %c0_5 = arith.constant 0 : index
    %4 = vector.load %arg2[%c0_3, %c0_4, %c0_5] : memref<2x4x256xf32, #tpu.memory_space<vmem>>, vector<1x4x256xf32>
    %5 = vector.shape_cast %4 : vector<1x4x256xf32> to vector<4x256xf32>
    %c0_6 = arith.constant 0 : index
    %c0_7 = arith.constant 0 : index
    %c0_8 = arith.constant 0 : index
    %6 = vector.load %arg3[%c0_6, %c0_7, %c0_8] : memref<2x4x256xf32, #tpu.memory_space<vmem>>, vector<1x4x256xf32>
    %7 = vector.shape_cast %6 : vector<1x4x256xf32> to vector<4x256xf32>
    %8 = vector.broadcast %1 : f32 to vector<4x256xf32>
    %9 = arith.mulf %8, %5 : vector<4x256xf32>
    %10 = vector.broadcast %2 : f32 to vector<4x256xf32>
    %11 = arith.mulf %10, %7 : vector<4x256xf32>
    %12 = arith.addf %9, %11 : vector<4x256xf32>
    %c0_9 = arith.constant 0 : index
    %c0_10 = arith.constant 0 : index
    %13 = vector.load %arg4[%c0_9, %c0_10] : memref<32x4xbf16, #tpu.memory_space<vmem>>, vector<32x4xbf16>
    %14 = arith.truncf %12 : vector<4x256xf32> to vector<4x256xbf16>
    %cst_11 = arith.constant dense<0.000000e+00> : vector<32x256xf32>
    %15 = tpu.matmul %13, %14, %cst_11 {dimension_numbers = #tpu.dot_dimension_numbers<[1], [0], [0], [1], [0, 0, 1, 1], [], []>} : vector<32x4xbf16>, vector<4x256xbf16>, vector<32x256xf32> -> vector<32x256xf32>
    %c0_12 = arith.constant 0 : index
    %c0_13 = arith.constant 0 : index
    %16 = vector.load %arg5[%c0_12, %c0_13] : memref<32x1xf32, #tpu.memory_space<vmem>>, vector<32x1xf32>
    %c0_14 = arith.constant 0 : index
    %c0_15 = arith.constant 0 : index
    %17 = vector.load %arg6[%c0_14, %c0_15] : memref<32x1xf32, #tpu.memory_space<vmem>>, vector<32x1xf32>
    %18 = vector.broadcast %3 : f32 to vector<32x1xf32>
    %19 = arith.mulf %17, %18 : vector<32x1xf32>
    %20 = arith.addf %16, %19 : vector<32x1xf32>
    %21 = vector.broadcast %20 : vector<32x1xf32> to vector<32x256xf32>
    %22 = arith.addf %15, %21 : vector<32x256xf32>
    %cst_16 = arith.constant 0.000000e+00 : f32
    %23 = vector.broadcast %cst_16 : f32 to vector<32x256xf32>
    %24 = arith.maximumf %22, %23 : vector<32x256xf32>
    %c0_17 = arith.constant 0 : index
    %c0_18 = arith.constant 0 : index
    %25 = vector.load %arg7[%c0_17, %c0_18] : memref<4x32xbf16, #tpu.memory_space<vmem>>, vector<4x32xbf16>
    %26 = arith.truncf %24 : vector<32x256xf32> to vector<32x256xbf16>
    %cst_19 = arith.constant dense<0.000000e+00> : vector<4x256xf32>
    %27 = tpu.matmul %25, %26, %cst_19 {dimension_numbers = #tpu.dot_dimension_numbers<[1], [0], [0], [1], [0, 0, 1, 1], [], []>} : vector<4x32xbf16>, vector<32x256xbf16>, vector<4x256xf32> -> vector<4x256xf32>
    %c0_20 = arith.constant 0 : index
    %c0_21 = arith.constant 0 : index
    %28 = vector.load %arg8[%c0_20, %c0_21] : memref<4x1xf32, #tpu.memory_space<vmem>>, vector<4x1xf32>
    %29 = vector.broadcast %28 : vector<4x1xf32> to vector<4x256xf32>
    %30 = arith.addf %27, %29 : vector<4x256xf32>
    %31 = arith.subf %30, %7 : vector<4x256xf32>
    %32 = arith.mulf %31, %31 : vector<4x256xf32>
    %cst_22 = arith.constant dense<0.000000e+00> : vector<256xf32>
    %33 = vector.multi_reduction <add>, %32, %cst_22 [0] : vector<4x256xf32> to vector<256xf32>
    %34 = vector.shape_cast %33 : vector<256xf32> to vector<1x256xf32>
    %35 = arith.addf %0, %34 : vector<1x256xf32>
    %c0_23 = arith.constant 0 : index
    %c1_24 = arith.constant 1 : index
    %36 = memref.load %arg1[%c0_23, %c1_24] : memref<3x2xf32, #tpu.memory_space<smem>>
    %c1_25 = arith.constant 1 : index
    %c1_26 = arith.constant 1 : index
    %37 = memref.load %arg1[%c1_25, %c1_26] : memref<3x2xf32, #tpu.memory_space<smem>>
    %c2_27 = arith.constant 2 : index
    %c1_28 = arith.constant 1 : index
    %38 = memref.load %arg1[%c2_27, %c1_28] : memref<3x2xf32, #tpu.memory_space<smem>>
    %c1_29 = arith.constant 1 : index
    %c0_30 = arith.constant 0 : index
    %c0_31 = arith.constant 0 : index
    %39 = vector.load %arg2[%c1_29, %c0_30, %c0_31] : memref<2x4x256xf32, #tpu.memory_space<vmem>>, vector<1x4x256xf32>
    %40 = vector.shape_cast %39 : vector<1x4x256xf32> to vector<4x256xf32>
    %c1_32 = arith.constant 1 : index
    %c0_33 = arith.constant 0 : index
    %c0_34 = arith.constant 0 : index
    %41 = vector.load %arg3[%c1_32, %c0_33, %c0_34] : memref<2x4x256xf32, #tpu.memory_space<vmem>>, vector<1x4x256xf32>
    %42 = vector.shape_cast %41 : vector<1x4x256xf32> to vector<4x256xf32>
    %43 = vector.broadcast %36 : f32 to vector<4x256xf32>
    %44 = arith.mulf %43, %40 : vector<4x256xf32>
    %45 = vector.broadcast %37 : f32 to vector<4x256xf32>
    %46 = arith.mulf %45, %42 : vector<4x256xf32>
    %47 = arith.addf %44, %46 : vector<4x256xf32>
    %c0_35 = arith.constant 0 : index
    %c0_36 = arith.constant 0 : index
    %48 = vector.load %arg4[%c0_35, %c0_36] : memref<32x4xbf16, #tpu.memory_space<vmem>>, vector<32x4xbf16>
    %49 = arith.truncf %47 : vector<4x256xf32> to vector<4x256xbf16>
    %cst_37 = arith.constant dense<0.000000e+00> : vector<32x256xf32>
    %50 = tpu.matmul %48, %49, %cst_37 {dimension_numbers = #tpu.dot_dimension_numbers<[1], [0], [0], [1], [0, 0, 1, 1], [], []>} : vector<32x4xbf16>, vector<4x256xbf16>, vector<32x256xf32> -> vector<32x256xf32>
    %c0_38 = arith.constant 0 : index
    %c0_39 = arith.constant 0 : index
    %51 = vector.load %arg5[%c0_38, %c0_39] : memref<32x1xf32, #tpu.memory_space<vmem>>, vector<32x1xf32>
    %c0_40 = arith.constant 0 : index
    %c0_41 = arith.constant 0 : index
    %52 = vector.load %arg6[%c0_40, %c0_41] : memref<32x1xf32, #tpu.memory_space<vmem>>, vector<32x1xf32>
    %53 = vector.broadcast %38 : f32 to vector<32x1xf32>
    %54 = arith.mulf %52, %53 : vector<32x1xf32>
    %55 = arith.addf %51, %54 : vector<32x1xf32>
    %56 = vector.broadcast %55 : vector<32x1xf32> to vector<32x256xf32>
    %57 = arith.addf %50, %56 : vector<32x256xf32>
    %cst_42 = arith.constant 0.000000e+00 : f32
    %58 = vector.broadcast %cst_42 : f32 to vector<32x256xf32>
    %59 = arith.maximumf %57, %58 : vector<32x256xf32>
    %c0_43 = arith.constant 0 : index
    %c0_44 = arith.constant 0 : index
    %60 = vector.load %arg7[%c0_43, %c0_44] : memref<4x32xbf16, #tpu.memory_space<vmem>>, vector<4x32xbf16>
    %61 = arith.truncf %59 : vector<32x256xf32> to vector<32x256xbf16>
    %cst_45 = arith.constant dense<0.000000e+00> : vector<4x256xf32>
    %62 = tpu.matmul %60, %61, %cst_45 {dimension_numbers = #tpu.dot_dimension_numbers<[1], [0], [0], [1], [0, 0, 1, 1], [], []>} : vector<4x32xbf16>, vector<32x256xbf16>, vector<4x256xf32> -> vector<4x256xf32>
    %c0_46 = arith.constant 0 : index
    %c0_47 = arith.constant 0 : index
    %63 = vector.load %arg8[%c0_46, %c0_47] : memref<4x1xf32, #tpu.memory_space<vmem>>, vector<4x1xf32>
    %64 = vector.broadcast %63 : vector<4x1xf32> to vector<4x256xf32>
    %65 = arith.addf %62, %64 : vector<4x256xf32>
    %66 = arith.subf %65, %42 : vector<4x256xf32>
    %67 = arith.mulf %66, %66 : vector<4x256xf32>
    %cst_48 = arith.constant dense<0.000000e+00> : vector<256xf32>
    %68 = vector.multi_reduction <add>, %67, %cst_48 [0] : vector<4x256xf32> to vector<256xf32>
    %69 = vector.shape_cast %68 : vector<256xf32> to vector<1x256xf32>
    %70 = arith.addf %35, %69 : vector<1x256xf32>
    %c0_49 = arith.constant 0 : index
    %c0_50 = arith.constant 0 : index
    %71 = vector.load %arg9[%c0_49, %c0_50] : memref<1x256xf32, #tpu.memory_space<vmem>>, vector<1x256xf32>
    tpu.vector_store %arg9[%c0_49, %c0_50], %70 {strides = array<i32>} : memref<1x256xf32, #tpu.memory_space<vmem>>, vector<1x256xf32>,
    return
  }
  func.func @transform_0(%arg0: i32) -> (i32, i32) {
    %c0_i32 = arith.constant 0 : i32
    %c0_i32_0 = arith.constant 0 : i32
    %c0_i32_1 = arith.constant 0 : i32
    return %c0_i32, %c0_i32_0 : i32, i32
  }
  func.func @transform_1(%arg0: i32) -> (i32, i32, i32) {
    %c0_i32 = arith.constant 0 : i32
    %c0_i32_0 = arith.constant 0 : i32
    %c0_i32_1 = arith.constant 0 : i32
    %c0_i32_2 = arith.constant 0 : i32
    return %c0_i32, %c0_i32_0, %c0_i32_1 : i32, i32, i32
  }
  func.func @transform_2(%arg0: i32) -> (i32, i32, i32) {
    %c0_i32 = arith.constant 0 : i32
    %c0_i32_0 = arith.constant 0 : i32
    %c0_i32_1 = arith.constant 0 : i32
    %c0_i32_2 = arith.constant 0 : i32
    return %c0_i32, %c0_i32_0, %c0_i32_1 : i32, i32, i32
  }
  func.func @transform_3(%arg0: i32) -> (i32, i32) {
    %c0_i32 = arith.constant 0 : i32
    %c0_i32_0 = arith.constant 0 : i32
    %c0_i32_1 = arith.constant 0 : i32
    return %c0_i32, %c0_i32_0 : i32, i32
  }
  func.func @transform_4(%arg0: i32) -> (i32, i32) {
    %c0_i32 = arith.constant 0 : i32
    %c0_i32_0 = arith.constant 0 : i32
    %c0_i32_1 = arith.constant 0 : i32
    return %c0_i32, %c0_i32_0 : i32, i32
  }
  func.func @transform_5(%arg0: i32) -> (i32, i32) {
    %c0_i32 = arith.constant 0 : i32
    %c0_i32_0 = arith.constant 0 : i32
    %c0_i32_1 = arith.constant 0 : i32
    return %c0_i32, %c0_i32_0 : i32, i32
  }
  func.func @transform_6(%arg0: i32) -> (i32, i32) {
    %c0_i32 = arith.constant 0 : i32
    %c0_i32_0 = arith.constant 0 : i32
    %c0_i32_1 = arith.constant 0 : i32
    return %c0_i32, %c0_i32_0 : i32, i32
  }
  func.func @transform_7(%arg0: i32) -> (i32, i32) {
    %c0_i32 = arith.constant 0 : i32
    %c0_i32_0 = arith.constant 0 : i32
    %c0_i32_1 = arith.constant 0 : i32
    return %c0_i32, %c0_i32_0 : i32, i32
  }
  func.func @transform_8(%arg0: i32) -> (i32, i32) {
    %c0_i32 = arith.constant 0 : i32
    %c0_i32_0 = arith.constant 0 : i32
    %c0_i32_1 = arith.constant 0 : i32
    return %c0_i32, %c0_i32_0 : i32, i32
  }
}

</mosaic_0001>

<llo_original>
// kernel: tpu_custom_call.1
$region0: #{tpu_custom_call.1}
  #allocation0 [shape = 'u32[]', space=smem, size = 0x4, offset = 0x4, fixed_abs, tag = 'smem constant byte address 0x4 - core index']
  #allocation1 [shape = 'u32[72,128]{1,0:T(1,128)}', space=vmem, size = 0x9000, scoped, tag = 'internal scratch']
  %s0 = inlined_call_operand.vmem [shape: f32[3,2], index: 0, kind: input, shape index: {}]
  %s1 = inlined_call_operand.vmem [shape: f32[2,4,256], index: 1, kind: input, shape index: {}]
  %s2 = inlined_call_operand.vmem [shape: f32[2,4,256], index: 2, kind: input, shape index: {}]
  %s3 = inlined_call_operand.vmem [shape: bf16[32,4], index: 3, kind: input, shape index: {}]
  %s4 = inlined_call_operand.vmem [shape: f32[32,1], index: 4, kind: input, shape index: {}]
  %s5 = inlined_call_operand.vmem [shape: f32[32,1], index: 5, kind: input, shape index: {}]
  %s6 = inlined_call_operand.vmem [shape: bf16[4,32], index: 6, kind: input, shape index: {}]
  %s7 = inlined_call_operand.vmem [shape: f32[4,1], index: 7, kind: input, shape index: {}]
  %s8 = inlined_call_operand.hbm [shape: f32[1,256], index: 8, kind: output, shape index: {}]
  %s9 = sld [smem:[#allocation0]]
  $region46: #{tpu_custom_call.1} parent=0
    _
  %s11 = ssub.s32 1, %s9
  %s12 = scalar_select 0, %s11, %s9
  $region1: #{tpu_custom_call.1} parent=0
    #allocation2 [shape = 'u8[2048]{0}', space=smem, size = 0x800, scoped, tag = 'input window, operand 0, single buffered']
    #allocation3 [shape = 's32[1]{0}', space=sflag, size = 0x4, scoped, tag = 'scoped memory for tpu_custom_call.1']
    #allocation4 [shape = 's32[1]{0}', space=sflag, size = 0x4, scoped, tag = 'scoped memory for tpu_custom_call.1']
    #allocation5 [shape = 'u8[1024]{0}', space=vmem, size = 0x400, scoped, tag = 'output window, operand 0, single buffered']
    %13 = vsyncpa [#allocation4], 0
    %14 = vsyncpa [#allocation3], 0
    // Predicated region
    $region2: #{tpu_custom_call.1} parent=1 // pred_check
      _
    $region3: #{tpu_custom_call.1} parent=1 // pred_check_branch
      %16 = sbr.rel (0) target = $region5
    $region4: #{tpu_custom_call.1} parent=1 // pred_region
      %18 = vsyncadd [#allocation4], 0
      %s20 = sshll.u32 %s0, 4
      %s21 = int_to_ptr.vmem [resolvable:$true] %s20
      %23 = dma.vmem_to_smem %s21, 64, [#allocation2], [#allocation4]
    $region5: #{tpu_custom_call.1} parent=1 // pred_fallthru
      _
    // Predicated region
    $region6: #{tpu_custom_call.1} parent=1 // pred_check
      _
    $region7: #{tpu_custom_call.1} parent=1 // pred_check_branch
      %25 = sbr.rel (0) target = $region9
    $region8: #{tpu_custom_call.1} parent=1 // pred_region
      _
    $region9: #{tpu_custom_call.1} parent=1 // pred_fallthru
      _
    // Predicated region
    $region10: #{tpu_custom_call.1} parent=1 // pred_check
      _
    $region11: #{tpu_custom_call.1} parent=1 // pred_check_branch
      %27 = sbr.rel (0) target = $region13
    $region12: #{tpu_custom_call.1} parent=1 // pred_region
      _
    $region13: #{tpu_custom_call.1} parent=1 // pred_fallthru
      _
    // Predicated region
    $region14: #{tpu_custom_call.1} parent=1 // pred_check
      _
    $region15: #{tpu_custom_call.1} parent=1 // pred_check_branch
      %29 = sbr.rel (0) target = $region17
    $region16: #{tpu_custom_call.1} parent=1 // pred_region
      _
    $region17: #{tpu_custom_call.1} parent=1 // pred_fallthru
      _
    // Predicated region
    $region18: #{tpu_custom_call.1} parent=1 // pred_check
      _
    $region19: #{tpu_custom_call.1} parent=1 // pred_check_branch
      %31 = sbr.rel (0) target = $region21
    $region20: #{tpu_custom_call.1} parent=1 // pred_region
      _
    $region21: #{tpu_custom_call.1} parent=1 // pred_fallthru
      _
    // Predicated region
    $region22: #{tpu_custom_call.1} parent=1 // pred_check
      _
    $region23: #{tpu_custom_call.1} parent=1 // pred_check_branch
      %33 = sbr.rel (0) target = $region25
    $region24: #{tpu_custom_call.1} parent=1 // pred_region
      _
    $region25: #{tpu_custom_call.1} parent=1 // pred_fallthru
      _
    // Predicated region
    $region26: #{tpu_custom_call.1} parent=1 // pred_check
      _
    $region27: #{tpu_custom_call.1} parent=1 // pred_check_branch
      %35 = sbr.rel (0) target = $region29
    $region28: #{tpu_custom_call.1} parent=1 // pred_region
      _
    $region29: #{tpu_custom_call.1} parent=1 // pred_fallthru
      _
    // Predicated region
    $region30: #{tpu_custom_call.1} parent=1 // pred_check
      _
    $region31: #{tpu_custom_call.1} parent=1 // pred_check_branch
      %37 = sbr.rel (0) target = $region33
    $region32: #{tpu_custom_call.1} parent=1 // pred_region
      _
    $region33: #{tpu_custom_call.1} parent=1 // pred_fallthru
      _
    // Predicated region
    $region34: #{tpu_custom_call.1} parent=1 // pred_check
      _
    $region35: #{tpu_custom_call.1} parent=1 // pred_check_branch
      %39 = sbr.rel (0) target = $region37
    $region36: #{tpu_custom_call.1} parent=1 // pred_region
      %41 = dma.done [#allocation4], 64
    $region37: #{tpu_custom_call.1} parent=1 // pred_fallthru
      _
    %42 = sfence
    %s44 = sld [smem:[#allocation2]]
    %s45 = sld [smem:[#allocation2 + $0x80]]
    %s46 = sld [smem:[#allocation2 + $0x100]]
    %v47 = vld [vmem:[%s1] sm:$0xff]
    %v48 = vld [vmem:[%s2] sm:$0xff]
    %v49 = vstv %s44
    %v50 = vmul.f32 %v49, %v47
    %v51 = vstv %s45
    %v52 = vmul.f32 %v51, %v48
    %v53 = vadd.f32 %v50, %v52
    %v54 = vld [vmem:[%s3] sm:$0xf]
    %v55 = vld [vmem:[%s3 + $0x4] sm:$0xf]
    %v56 = vld [vmem:[%s3 + $0x8] sm:$0xf]
    %v57 = vld [vmem:[%s3 + $0xc] sm:$0xf]
    %59 = vst [vmem:[#allocation1] ss:$2 sm:$0xff] %v53
    %v60 = vld.sshfl [vmem:[#allocation1] sm:$0xff pattern:$0x75316420]
    %v61 = vld.sshfl [vmem:[#allocation1 + $0x8] sm:$0xff pattern:$0x75316420]
    %v64 = vpack.c.bf16 %v60, %v60
    %v65 = vpack.c.bf16 %v61, %v61
    %v66 = vld [vmem:[%s4] sm:$0xff]
    %v67 = vld [vmem:[%s4 + $0x8] sm:$0xff]
    %v68 = vld [vmem:[%s4 + $0x10] sm:$0xff]
    %v69 = vld [vmem:[%s4 + $0x18] sm:$0xff]
    %v70 = vld [vmem:[%s5] sm:$0xff]
    %v71 = vld [vmem:[%s5 + $0x8] sm:$0xff]
    %v72 = vld [vmem:[%s5 + $0x10] sm:$0xff]
    %v73 = vld [vmem:[%s5 + $0x18] sm:$0xff]
    %v74 = vstv %s46
    %v75 = vmul.f32 %v70, %v74
    %v76 = vmul.f32 %v71, %v74
    %v77 = vmul.f32 %v72, %v74
    %v78 = vmul.f32 %v73, %v74
    %v79 = vadd.f32 %v66, %v75
    %v80 = vadd.f32 %v67, %v76
    %v81 = vadd.f32 %v68, %v77
    %v82 = vadd.f32 %v69, %v78
    %84 = vset.pattern.permute.xlu0 0
    %85 = vperm.xlu0 %84, %v79
    %v86 = vpop.permute.xlu0 %85
    %89 = vset.pattern.permute.xlu0 0
    %90 = vperm.xlu0 %89, %v80
    %v91 = vpop.permute.xlu0 %90
    %94 = vset.pattern.permute.xlu0 0
    %95 = vperm.xlu0 %94, %v81
    %v96 = vpop.permute.xlu0 %95
    %99 = vset.pattern.permute.xlu0 0
    %100 = vperm.xlu0 %99, %v82
    %v101 = vpop.permute.xlu0 %100
    %v107 = vunpack.c.l.b16 %v54
    %v108 = vunpack.c.l.b16 %v55
    %v109 = vunpack.c.l.b16 %v56
    %v110 = vunpack.c.l.b16 %v57
    %v111 = vpack.c.b16 %v108, %v107
    %v112 = vpack.c.b16 %v110, %v109
    %vm113 = vcmask 31744
    %v115 = vsel %vm113, %v111, 0
    %v118 = vsel %vm113, %v112, 0
    %vm120 = vcmask 1041408
    %v122 = vsel %vm120, %v64, 0
    %v125 = vsel %vm120, %v65, 0
    %127 = vmatpush.bf16.msra.mxu0 0
    %128 = vmatpush.bf16.msra.mxu0 0
    %129 = vmatpush.bf16.msra.mxu0 0
    %130 = vmatpush.bf16.msra.mxu0 0
    %131 = vmatpush.bf16.msra.mxu0 0
    %132 = vmatpush.bf16.msra.mxu0 0
    %133 = vmatpush.bf16.msra.mxu0 0
    %134 = vmatpush.bf16.msra.mxu0 %v122
    %135 = vmatmul.bf16.gmra.mxu0 %v115
    %v136 = vpop.f32.mrf.mxu0
    %v137 = vadd.f32 %v86, %v136
    %v138 = vpop.f32.mrf.mxu0
    %v139 = vadd.f32 %v91, %v138
    %140 = vmatmul.bf16.gmra.mxu0 %v118
    %v141 = vpop.f32.mrf.mxu0
    %v142 = vadd.f32 %v96, %v141
    %v143 = vpop.f32.mrf.mxu0
    %v144 = vadd.f32 %v101, %v143
    %145 = vdwg.mxu0
    %146 = vmatpush.bf16.msra.mxu0 0
    %147 = vmatpush.bf16.msra.mxu0 0
    %148 = vmatpush.bf16.msra.mxu0 0
    %149 = vmatpush.bf16.msra.mxu0 0
    %150 = vmatpush.bf16.msra.mxu0 0
    %151 = vmatpush.bf16.msra.mxu0 0
    %152 = vmatpush.bf16.msra.mxu0 0
    %153 = vmatpush.bf16.msra.mxu0 %v125
    %154 = vmatmul.bf16.gmra.mxu0 %v115
    %v155 = vpop.f32.mrf.mxu0
    %v156 = vadd.f32 %v86, %v155
    %v157 = vpop.f32.mrf.mxu0
    %v158 = vadd.f32 %v91, %v157
    %159 = vmatmul.bf16.gmra.mxu0 %v118
    %v160 = vpop.f32.mrf.mxu0
    %v161 = vadd.f32 %v96, %v160
    %v162 = vpop.f32.mrf.mxu0
    %v163 = vadd.f32 %v101, %v162
    %164 = vdwg.mxu0
    %v165 = vmax.f32 %v137, 0.0
    %v166 = vmax.f32 %v156, 0.0
    %v167 = vmax.f32 %v139, 0.0
    %v168 = vmax.f32 %v158, 0.0
    %v169 = vmax.f32 %v142, 0.0
    %v170 = vmax.f32 %v161, 0.0
    %v171 = vmax.f32 %v144, 0.0
    %v172 = vmax.f32 %v163, 0.0
    %v173 = vld [vmem:[%s6] sm:$0x3]
    %v174 = vpack.c.bf16 %v167, %v165
    %v175 = vpack.c.bf16 %v168, %v166
    %v176 = vpack.c.bf16 %v171, %v169
    %v177 = vpack.c.bf16 %v172, %v170
    %v178 = vld [vmem:[%s7] sm:$0xf]
    %180 = vset.pattern.permute.xlu0 0
    %181 = vperm.xlu0 %180, %v178
    %v182 = vpop.permute.xlu0 %181
    %vm184 = vcmask 261120
    %v186 = vsel %vm184, %v173, 0
    %188 = vmatpush.bf16.msra.mxu0 0
    %189 = vmatpush.bf16.msra.mxu0 0
    %190 = vmatpush.bf16.msra.mxu0 0
    %191 = vmatpush.bf16.msra.mxu0 0
    %192 = vmatpush.bf16.msra.mxu0 0
    %193 = vmatpush.bf16.msra.mxu0 0
    %194 = vmatpush.bf16.msra.mxu0 %v176
    %195 = vmatpush.bf16.msra.mxu0 %v174
    %196 = vmatmul.bf16.gmra.mxu0 %v186
    %v197 = vpop.f32.mrf.mxu0
    %v198 = vadd.f32 %v182, %v197
    %v199 = vpop.f32.mrf.mxu0
    %200 = vdwg.mxu0
    %201 = vmatpush.bf16.msra.mxu0 0
    %202 = vmatpush.bf16.msra.mxu0 0
    %203 = vmatpush.bf16.msra.mxu0 0
    %204 = vmatpush.bf16.msra.mxu0 0
    %205 = vmatpush.bf16.msra.mxu0 0
    %206 = vmatpush.bf16.msra.mxu0 0
    %207 = vmatpush.bf16.msra.mxu0 %v177
    %208 = vmatpush.bf16.msra.mxu0 %v175
    %209 = vmatmul.bf16.gmra.mxu0 %v186
    %v210 = vpop.f32.mrf.mxu0
    %v211 = vadd.f32 %v182, %v210
    %v212 = vpop.f32.mrf.mxu0
    %213 = vdwg.mxu0
    %215 = vst [vmem:[#allocation1] ss:$2 sm:$0xff] %v48
    %v216 = vld.sshfl [vmem:[#allocation1] sm:$0xff pattern:$0x75316420]
    %v217 = vld.sshfl [vmem:[#allocation1 + $0x8] sm:$0xff pattern:$0x75316420]
    %v220 = vsub.f32 %v198, %v216
    %v221 = vsub.f32 %v211, %v217
    %v222 = vmul.f32 %v220, %v220
    %v223 = vmul.f32 %v221, %v221
    %vm224 = vcmask 1043456
    %v225 = vsel %vm224, %v222, 0.0
    %v226 = vrot.slane %v225, 4
    %v227 = vadd.f32 %v225, %v226
    %v228 = vrot.slane %v227, 2
    %v229 = vadd.f32 %v227, %v228
    %v230 = vrot.slane %v229, 1
    %v231 = vadd.f32 %v229, %v230
    %v232 = vsel %vm224, %v223, 0.0
    %v233 = vrot.slane %v232, 4
    %v234 = vadd.f32 %v232, %v233
    %v235 = vrot.slane %v234, 2
    %v236 = vadd.f32 %v234, %v235
    %v237 = vrot.slane %v236, 1
    %v238 = vadd.f32 %v236, %v237
    %v239 = vadd.f32 %v231, 0.0
    %v240 = vadd.f32 %v238, 0.0
    %s241 = sld [smem:[#allocation2 + $0x1]]
    %s242 = sld [smem:[#allocation2 + $0x81]]
    %s243 = sld [smem:[#allocation2 + $0x101]]
    %s244 = scalar_lea.vmem %s1, 8
    %v245 = vld [vmem:[%s244] sm:$0xff]
    %s246 = scalar_lea.vmem %s2, 8
    %v247 = vld [vmem:[%s246] sm:$0xff]
    %v248 = vstv %s241
    %v249 = vmul.f32 %v248, %v245
    %v250 = vstv %s242
    %v251 = vmul.f32 %v250, %v247
    %v252 = vadd.f32 %v249, %v251
    %254 = vst [vmem:[#allocation1] ss:$2 sm:$0xff] %v252
    %v255 = vld.sshfl [vmem:[#allocation1] sm:$0xff pattern:$0x75316420]
    %v256 = vld.sshfl [vmem:[#allocation1 + $0x8] sm:$0xff pattern:$0x75316420]
    %v259 = vpack.c.bf16 %v255, %v255
    %v260 = vpack.c.bf16 %v256, %v256
    %v261 = vstv %s243
    %v262 = vmul.f32 %v70, %v261
    %v263 = vmul.f32 %v71, %v261
    %v264 = vmul.f32 %v72, %v261
    %v265 = vmul.f32 %v73, %v261
    %v266 = vadd.f32 %v66, %v262
    %v267 = vadd.f32 %v67, %v263
    %v268 = vadd.f32 %v68, %v264
    %v269 = vadd.f32 %v69, %v265
    %271 = vset.pattern.permute.xlu0 0
    %272 = vperm.xlu0 %271, %v266
    %v273 = vpop.permute.xlu0 %272
    %276 = vset.pattern.permute.xlu0 0
    %277 = vperm.xlu0 %276, %v267
    %v278 = vpop.permute.xlu0 %277
    %281 = vset.pattern.permute.xlu0 0
    %282 = vperm.xlu0 %281, %v268
    %v283 = vpop.permute.xlu0 %282
    %286 = vset.pattern.permute.xlu0 0
    %287 = vperm.xlu0 %286, %v269
    %v288 = vpop.permute.xlu0 %287
    %v291 = vsel %vm120, %v259, 0
    %v294 = vsel %vm120, %v260, 0
    %296 = vmatpush.bf16.msra.mxu0 0
    %297 = vmatpush.bf16.msra.mxu0 0
    %298 = vmatpush.bf16.msra.mxu0 0
    %299 = vmatpush.bf16.msra.mxu0 0
    %300 = vmatpush.bf16.msra.mxu0 0
    %301 = vmatpush.bf16.msra.mxu0 0
    %302 = vmatpush.bf16.msra.mxu0 0
    %303 = vmatpush.bf16.msra.mxu0 %v291
    %304 = vmatmul.bf16.gmra.mxu0 %v115
    %v305 = vpop.f32.mrf.mxu0
    %v306 = vadd.f32 %v273, %v305
    %v307 = vpop.f32.mrf.mxu0
    %v308 = vadd.f32 %v278, %v307
    %309 = vmatmul.bf16.gmra.mxu0 %v118
    %v310 = vpop.f32.mrf.mxu0
    %v311 = vadd.f32 %v283, %v310
    %v312 = vpop.f32.mrf.mxu0
    %v313 = vadd.f32 %v288, %v312
    %314 = vdwg.mxu0
    %315 = vmatpush.bf16.msra.mxu0 0
    %316 = vmatpush.bf16.msra.mxu0 0
    %317 = vmatpush.bf16.msra.mxu0 0
    %318 = vmatpush.bf16.msra.mxu0 0
    %319 = vmatpush.bf16.msra.mxu0 0
    %320 = vmatpush.bf16.msra.mxu0 0
    %321 = vmatpush.bf16.msra.mxu0 0
    %322 = vmatpush.bf16.msra.mxu0 %v294
    %323 = vmatmul.bf16.gmra.mxu0 %v115
    %v324 = vpop.f32.mrf.mxu0
    %v325 = vadd.f32 %v273, %v324
    %v326 = vpop.f32.mrf.mxu0
    %v327 = vadd.f32 %v278, %v326
    %328 = vmatmul.bf16.gmra.mxu0 %v118
    %v329 = vpop.f32.mrf.mxu0
    %v330 = vadd.f32 %v283, %v329
    %v331 = vpop.f32.mrf.mxu0
    %v332 = vadd.f32 %v288, %v331
    %333 = vdwg.mxu0
    %v334 = vmax.f32 %v306, 0.0
    %v335 = vmax.f32 %v325, 0.0
    %v336 = vmax.f32 %v308, 0.0
    %v337 = vmax.f32 %v327, 0.0
    %v338 = vmax.f32 %v311, 0.0
    %v339 = vmax.f32 %v330, 0.0
    %v340 = vmax.f32 %v313, 0.0
    %v341 = vmax.f32 %v332, 0.0
    %v342 = vpack.c.bf16 %v336, %v334
    %v343 = vpack.c.bf16 %v337, %v335
    %v344 = vpack.c.bf16 %v340, %v338
    %v345 = vpack.c.bf16 %v341, %v339
    %346 = vmatpush.bf16.msra.mxu0 0
    %347 = vmatpush.bf16.msra.mxu0 0
    %348 = vmatpush.bf16.msra.mxu0 0
    %349 = vmatpush.bf16.msra.mxu0 0
    %350 = vmatpush.bf16.msra.mxu0 0
    %351 = vmatpush.bf16.msra.mxu0 0
    %352 = vmatpush.bf16.msra.mxu0 %v344
    %353 = vmatpush.bf16.msra.mxu0 %v342
    %354 = vmatmul.bf16.gmra.mxu0 %v186
    %v355 = vpop.f32.mrf.mxu0
    %v356 = vadd.f32 %v182, %v355
    %v357 = vpop.f32.mrf.mxu0
    %358 = vdwg.mxu0
    %359 = vmatpush.bf16.msra.mxu0 0
    %360 = vmatpush.bf16.msra.mxu0 0
    %361 = vmatpush.bf16.msra.mxu0 0
    %362 = vmatpush.bf16.msra.mxu0 0
    %363 = vmatpush.bf16.msra.mxu0 0
    %364 = vmatpush.bf16.msra.mxu0 0
    %365 = vmatpush.bf16.msra.mxu0 %v345
    %366 = vmatpush.bf16.msra.mxu0 %v343
    %367 = vmatmul.bf16.gmra.mxu0 %v186
    %v368 = vpop.f32.mrf.mxu0
    %v369 = vadd.f32 %v182, %v368
    %v370 = vpop.f32.mrf.mxu0
    %371 = vdwg.mxu0
    %373 = vst [vmem:[#allocation1] ss:$2 sm:$0xff] %v247
    %v374 = vld.sshfl [vmem:[#allocation1] sm:$0xff pattern:$0x75316420]
    %v375 = vld.sshfl [vmem:[#allocation1 + $0x8] sm:$0xff pattern:$0x75316420]
    %v378 = vsub.f32 %v356, %v374
    %v379 = vsub.f32 %v369, %v375
    %v380 = vmul.f32 %v378, %v378
    %v381 = vmul.f32 %v379, %v379
    %v382 = vsel %vm224, %v380, 0.0
    %v383 = vrot.slane %v382, 4
    %v384 = vadd.f32 %v382, %v383
    %v385 = vrot.slane %v384, 2
    %v386 = vadd.f32 %v384, %v385
    %v387 = vrot.slane %v386, 1
    %v388 = vadd.f32 %v386, %v387
    %v389 = vsel %vm224, %v381, 0.0
    %v390 = vrot.slane %v389, 4
    %v391 = vadd.f32 %v389, %v390
    %v392 = vrot.slane %v391, 2
    %v393 = vadd.f32 %v391, %v392
    %v394 = vrot.slane %v393, 1
    %v395 = vadd.f32 %v393, %v394
    %v396 = vadd.f32 %v239, %v388
    %v397 = vadd.f32 %v240, %v395
    %v400 = vrot.slane %v397, 7
    %vm401 = vcmask 1040384
    %v402 = vsel %vm401, %v396, %v400
    %v404 = vlaneseq
    %vm405 = vcmp.ge.s32.totalorder %v404, 0
    %vm406 = vcmp.lt.s32.totalorder %v404, 256
    %vm407 = vmand %vm405, %vm406
    %408 = vst.msk [vmem:[#allocation5] sm:$0x3] %vm407, %v402
    // Predicated region
    $region38: #{tpu_custom_call.1} parent=1 // pred_check
      _
    $region39: #{tpu_custom_call.1} parent=1 // pred_check_branch
      %410 = sbr.rel (0) target = $region41
    $region40: #{tpu_custom_call.1} parent=1 // pred_region
      %412 = vsyncadd [#allocation3], 0
      %s414 = sshll.u32 [#allocation5], 4
      %s415 = int_to_ptr.vmem [resolvable:$true] %s414
      %s416 = sshll.u32 %s8, 4
      %s417 = int_to_ptr.hbm [resolvable:$true] %s416
      %419 = dma.vmem_to_hbm [thread:$0]  %s415, 32, %s417, [#allocation3]
    $region41: #{tpu_custom_call.1} parent=1 // pred_fallthru
      _
    // Predicated region
    $region42: #{tpu_custom_call.1} parent=1 // pred_check
      _
    $region43: #{tpu_custom_call.1} parent=1 // pred_check_branch
      %421 = sbr.rel (0) target = $region45
    $region44: #{tpu_custom_call.1} parent=1 // pred_region
      %423 = dma.done [#allocation3], 32
    $region45: #{tpu_custom_call.1} parent=1 // pred_fallthru
      _
    %424 = vsyncpa [#allocation3], 1
    %425 = vsyncpa [#allocation4], 1

</llo_original>
